<compile_context>
chip_gen: v7x
topology: tpu7x:2x2x1
jax: 0.10.0
libtpu: 0.0.40
codegen_flags: <defaults>
</compile_context>

<pallas_src>
import functools

import jax
import jax.numpy as jnp
import numpy as np
from jax.experimental import pallas as pl
from jax.experimental.pallas import tpu as pltpu

_BN_EPS = 1e-5


# ----------------------------------------------------------------------------
# Helpers
# ----------------------------------------------------------------------------
def _pick_tile(dim, target, quantum):
    """Largest multiple of `quantum` that divides `dim` and is <= target.

    Falls back to the full dim (always legal for BlockSpec).  NOTE: for dims
    with awkward factorizations this fallback can exceed the intended VMEM
    budget; pad the input if that ever matters.
    """
    if dim <= target:
        return dim
    t = (target // quantum) * quantum
    while t >= quantum:
        if dim % t == 0:
            return t
        t -= quantum
    return dim


def _mosaic_params(block_bytes, semantics):
    # Explicit scoped-VMEM limit: room for double-buffered blocks + margin,
    # clamped to [32 MiB, 64 MiB] (<= v7x physical VMEM, >= v5e/v6e defaults).
    limit = int(min(max(2 * block_bytes + (8 << 20), 32 << 20), 64 << 20))
    return pltpu.CompilerParams(dimension_semantics=semantics,
                                vmem_limit_bytes=limit)


# ----------------------------------------------------------------------------
# Pallas kernels
# ----------------------------------------------------------------------------
def _global_pool_kernel(x_ref, p_ref, *, inv_hw):
    # x_ref: (tbc, thw) f32 -- flattened (batch*channel, spatial) rows.
    # p_ref: (tbc, 1) f32 output block; its block index is constant over the
    # spatial grid axis, so it doubles as the accumulator (no scratch needed).
    j = pl.program_id(1)

    @pl.when(j == 0)
    def _():
        p_ref[...] = jnp.zeros_like(p_ref)

    p_ref[...] += jnp.sum(x_ref[...], axis=-1, keepdims=True)

    @pl.when(j == pl.num_programs(1) - 1)
    def _():
        p_ref[...] *= inv_hw


def _linear_bn_relu_kernel(x_ref, w_ref, g_ref, b_ref, o_ref, acc_ref,
                           *, n_views, rows_per_view):
    # x_ref: (M, tk) bf16; w_ref: (tk, tn) bf16; g/b_ref: (1, tn) f32
    # o_ref: (M, tn); acc_ref: (M, tn) f32.  M = n_views * batch.
    k = pl.program_id(1)

    @pl.when(k == 0)
    def _():
        acc_ref[...] = jnp.zeros_like(acc_ref)

    acc_ref[...] += jnp.dot(x_ref[...], w_ref[...],
                            preferred_element_type=jnp.float32)

    @pl.when(k == pl.num_programs(1) - 1)
    def _():
        gamma = g_ref[...]
        beta = b_ref[...]
        inv_rows = 1.0 / rows_per_view
        # Per-view batch statistics (static row slices), single pass over acc:
        # var = E[h^2] - mean^2 (clamped >= 0), fused scale/shift + ReLU.
        for v in range(n_views):
            rows = pl.ds(v * rows_per_view, rows_per_view)
            h = acc_ref[rows, :]
            mu = jnp.sum(h, axis=0, keepdims=True) * inv_rows
            ex2 = jnp.sum(h * h, axis=0, keepdims=True) * inv_rows
            var = jnp.maximum(ex2 - mu * mu, 0.0)
            a = gamma * jax.lax.rsqrt(var + _BN_EPS)   # fused scale
            c = beta - mu * a                          # fused shift
            o_ref[rows, :] = jnp.maximum(h * a + c, 0.0).astype(o_ref.dtype)


def _linear_bias_kernel(x_ref, w_ref, b_ref, o_ref, acc_ref):
    # x_ref: (M, tk) bf16; w_ref: (tk, tn) bf16; b_ref: (1, tn) f32
    k = pl.program_id(1)

    @pl.when(k == 0)
    def _():
        acc_ref[...] = jnp.zeros_like(acc_ref)

    acc_ref[...] += jnp.dot(x_ref[...], w_ref[...],
                            preferred_element_type=jnp.float32)

    @pl.when(k == pl.num_programs(1) - 1)
    def _():
        o_ref[...] = (acc_ref[...] + b_ref[...]).astype(o_ref.dtype)


# ----------------------------------------------------------------------------
# pallas_call wrappers
# ----------------------------------------------------------------------------
def global_avg_pool(x2d, *, tbc_target=1024, thw_target=2048):
    """x2d: (M*C, HW) f32 -> per-row spatial mean, (M*C, 1) f32."""
    MC, HW = x2d.shape
    tbc = _pick_tile(MC, tbc_target, 8)
    thw = _pick_tile(HW, thw_target, 128)
    grid = (MC // tbc, HW // thw)
    block_bytes = tbc * thw * 4 + tbc * 4
    kernel = functools.partial(_global_pool_kernel, inv_hw=1.0 / HW)
    return pl.pallas_call(
        kernel,
        out_shape=jax.ShapeDtypeStruct((MC, 1), jnp.float32),
        grid_spec=pltpu.PrefetchScalarGridSpec(
            num_scalar_prefetch=0,
            grid=grid,
            in_specs=[pl.BlockSpec((tbc, thw), lambda i, j: (i, j))],
            out_specs=pl.BlockSpec((tbc, 1), lambda i, j: (i, 0)),
        ),
        compiler_params=_mosaic_params(block_bytes, ("parallel", "arbitrary")),
    )(x2d)


def linear_bn_relu_apply(x, w, g, b, n_views, *, tn_target=512, tk_cap=8192,
                         out_dtype=jnp.bfloat16):
    """x: (M, K) bf16, w: (K, N) bf16 -> relu(BN(x @ w)) per view, (M, N)."""
    M, K = x.shape
    N = w.shape[1]
    tn = _pick_tile(N, tn_target, 128)   # lane-dense output tiles
    tk = _pick_tile(K, tk_cap, 128)      # tk == K keeps x resident across tiles
    grid = (N // tn, K // tk)            # reduction axis (K) last
    block_bytes = (M * tk * x.dtype.itemsize + tk * tn * w.dtype.itemsize
                   + M * tn * 4 + M * tn * jnp.dtype(out_dtype).itemsize
                   + 2 * tn * 4)
    kernel = functools.partial(_linear_bn_relu_kernel,
                               n_views=n_views, rows_per_view=M // n_views)
    return pl.pallas_call(
        kernel,
        out_shape=jax.ShapeDtypeStruct((M, N), out_dtype),
        grid_spec=pltpu.PrefetchScalarGridSpec(
            num_scalar_prefetch=0,
            grid=grid,
            in_specs=[
                # x block index is constant (0, k); with tk == K it is fetched
                # once and held in VMEM instead of re-streamed per output tile.
                pl.BlockSpec((M, tk), lambda j, k: (0, k)),
                pl.BlockSpec((tk, tn), lambda j, k: (k, j)),
                pl.BlockSpec((1, tn), lambda j, k: (0, j)),
                pl.BlockSpec((1, tn), lambda j, k: (0, j)),
            ],
            out_specs=pl.BlockSpec((M, tn), lambda j, k: (0, j)),
            scratch_shapes=[pltpu.VMEM((M, tn), jnp.float32)],
        ),
        compiler_params=_mosaic_params(block_bytes, ("parallel", "arbitrary")),
    )(x, w, g, b)


def linear_bias_apply(x, w, b, *, tn_target=512, tk_cap=8192,
                      out_dtype=jnp.float32):
    """x: (M, K) bf16, w: (K, N) bf16 -> x @ w + b, (M, N)."""
    M, K = x.shape
    N = w.shape[1]
    tn = _pick_tile(N, tn_target, 128)
    tk = _pick_tile(K, tk_cap, 128)
    grid = (N // tn, K // tk)
    block_bytes = (M * tk * x.dtype.itemsize + tk * tn * w.dtype.itemsize
                   + M * tn * 4 + M * tn * jnp.dtype(out_dtype).itemsize
                   + tn * 4)
    return pl.pallas_call(
        _linear_bias_kernel,
        out_shape=jax.ShapeDtypeStruct((M, N), out_dtype),
        grid_spec=pltpu.PrefetchScalarGridSpec(
            num_scalar_prefetch=0,
            grid=grid,
            in_specs=[
                pl.BlockSpec((M, tk), lambda j, k: (0, k)),
                pl.BlockSpec((tk, tn), lambda j, k: (k, j)),
                pl.BlockSpec((1, tn), lambda j, k: (0, j)),
            ],
            out_specs=pl.BlockSpec((M, tn), lambda j, k: (0, j)),
            scratch_shapes=[pltpu.VMEM((M, tn), jnp.float32)],
        ),
        compiler_params=_mosaic_params(block_bytes, ("parallel", "arbitrary")),
    )(x, w, b)


def backbone_apply(x, wb, bb, *, hw_chunk=2048):
    """x: (M, C, H, W) f32 -> features (M, num_ftrs) bf16.

    Synthetic ResNet-50 stand-in: global average pool over the flattened
    (M*C, H*W) layout (no sublane padding on C) + flatten + 1x1 pointwise conv
    with bias.  Pooling and the pointwise conv commute, so pooling runs first
    and the conv is a tiny (M, C) @ (C, F) matmul.
    """
    M, C, H, W = x.shape
    x2d = x.reshape(M * C, H * W)                        # layout-preserving reshape
    pooled = global_avg_pool(x2d, thw_target=hw_chunk)   # (M*C, 1) f32
    pooled = pooled.reshape(M, C).astype(jnp.bfloat16)   # tiny cast
    return linear_bias_apply(pooled, wb, bb, out_dtype=jnp.bfloat16)


def projection_apply(f, params, n_views):
    """f: (M, num_ftrs) bf16 -> projection (M, out_dim) f32. M = n_views * B."""
    h = linear_bn_relu_apply(f, params["w1"], params["g1"], params["b1"], n_views)
    h = linear_bn_relu_apply(h, params["w2"], params["g2"], params["b2"], n_views)
    return linear_bias_apply(h, params["w3"], params["b3"], out_dtype=jnp.float32)


def barlow_twins_forward(params, x0, x1=None, return_features=False,
                         *, backbone_hw_chunk=2048):
    """Mirrors BarlowTwins.forward semantics (both views fused into one pass:
    every weight tile is streamed from HBM once, BN statistics stay per-view)."""
    n_views = 1 if x1 is None else 2
    x = x0 if x1 is None else jnp.concatenate([x0, x1], axis=0)
    B = x0.shape[0]

    f = backbone_apply(x, params["wb"], params["bb"],
                       hw_chunk=backbone_hw_chunk)        # (nV*B, F) bf16
    z = projection_apply(f, params, n_views)              # (nV*B, O) f32

    if x1 is None:
        return (z, f.astype(jnp.float32)) if return_features else z
    z0, z1 = z[:B], z[B:]
    if return_features:
        f32 = f.astype(jnp.float32)
        return (z0, f32[:B]), (z1, f32[B:])
    return z0, z1


# ----------------------------------------------------------------------------
# Deterministic parameter init (synthetic; no checkpoint load)
# Weights are stored in bf16 ONCE here; BN affine params / biases stay f32.
# ----------------------------------------------------------------------------
def init_params(key, channels, num_ftrs, proj_hidden_dim, out_dim):
    ks = jax.random.split(key, 4)
    s = 0.02

    def w(k, shape):
        return (s * jax.random.normal(k, shape, jnp.float32)).astype(jnp.bfloat16)

    return {
        "wb": w(ks[0], (channels, num_ftrs)),
        "bb": jnp.zeros((1, num_ftrs), jnp.float32),
        "w1": w(ks[1], (num_ftrs, proj_hidden_dim)),
        "g1": jnp.ones((1, proj_hidden_dim), jnp.float32),
        "b1": jnp.zeros((1, proj_hidden_dim), jnp.float32),
        "w2": w(ks[2], (proj_hidden_dim, proj_hidden_dim)),
        "g2": jnp.ones((1, proj_hidden_dim), jnp.float32),
        "b2": jnp.zeros((1, proj_hidden_dim), jnp.float32),
        "w3": w(ks[3], (proj_hidden_dim, out_dim)),
        "b3": jnp.zeros((1, out_dim), jnp.float32),
    }


# ----------------------------------------------------------------------------
# Pure-JAX reference (same mixed precision as the kernels, per-view BN stats)
# ----------------------------------------------------------------------------
def _reference_forward(params, x, n_views):
    M, C, H, W = x.shape
    pooled = jnp.mean(x.astype(jnp.float32).reshape(M, C, H * W), axis=-1)
    f = (jnp.dot(pooled.astype(jnp.bfloat16), params["wb"],
                 preferred_element_type=jnp.float32)
         + params["bb"]).astype(jnp.bfloat16)
    rows = M // n_views

    def bn_relu(h, g, b):
        mu = jnp.mean(h, axis=0, keepdims=True)
        var = jnp.mean((h - mu) ** 2, axis=0, keepdims=True)
        a = g * jax.lax.rsqrt(var + _BN_EPS)
        return jnp.maximum(h * a + (b - mu * a), 0.0)

    def head(fv):
        h = jnp.dot(fv, params["w1"], preferred_element_type=jnp.float32)
        h = bn_relu(h, params["g1"], params["b1"]).astype(jnp.bfloat16)
        h = jnp.dot(h, params["w2"], preferred_element_type=jnp.float32)
        h = bn_relu(h, params["g2"], params["b2"]).astype(jnp.bfloat16)
        return jnp.dot(h, params["w3"], preferred_element_type=jnp.float32) + params["b3"]

    outs = [head(f[v * rows:(v + 1) * rows]) for v in range(n_views)]
    return jnp.concatenate(outs, axis=0), f.astype(jnp.float32)


if __name__ == "__main__":
    # Small shapes consistent with the module's forward (bsz x channels x W x H).
    B, C, H, W = 2, 4, 16, 16
    num_ftrs, proj_hidden_dim, out_dim = 32, 64, 64

    key = jax.random.PRNGKey(0)
    k_params, k_x0, k_x1 = jax.random.split(key, 3)
    params = init_params(k_params, C, num_ftrs, proj_hidden_dim, out_dim)

    x0 = jax.random.normal(k_x0, (B, C, H, W), jnp.float32)
    x1 = jax.random.normal(k_x1, (B, C, H, W), jnp.float32)

    # two inputs, two outputs, with features (small HW chunk exercises the
    # gridded spatial-reduction / output-accumulator path)
    (out0, f0), (out1, f1) = barlow_twins_forward(
        params, x0, x1, return_features=True, backbone_hw_chunk=128)
    # single input path as well
    out_single = barlow_twins_forward(params, x0, backbone_hw_chunk=128)

    jax.block_until_ready((out0, f0, out1, f1, out_single))

    assert out0.shape == (B, out_dim) and out1.shape == (B, out_dim)
    assert f0.shape == (B, num_ftrs) and f1.shape == (B, num_ftrs)
    assert out_single.shape == (B, out_dim)

    # correctness vs pure-JAX reference using identical mixed precision
    x_all = jnp.concatenate([x0, x1], axis=0)
    ref_out, ref_f = _reference_forward(params, x_all, n_views=2)
    np.testing.assert_allclose(np.asarray(jnp.concatenate([out0, out1], axis=0)),
                               np.asarray(ref_out), rtol=5e-2, atol=1e-2)
    np.testing.assert_allclose(np.asarray(jnp.concatenate([f0, f1], axis=0)),
                               np.asarray(ref_f), rtol=5e-2, atol=1e-3)

    print("KERNEL_OK")
</pallas_src>

<mosaic_0001>
module attributes {stable_mosaic.version = 11 : i64} {
  func.func @_global_pool_kernel(%arg0: i32, %arg1: i32, %arg2: memref<16x128xf32, #tpu.memory_space<vmem>>, %arg3: memref<16x1xf32, #tpu.memory_space<vmem>>) attributes {dimension_semantics = [#tpu.dimension_semantics<parallel>, #tpu.dimension_semantics<arbitrary>], iteration_bounds = array<i64: 1, 2>, scalar_prefetch = 0 : i64, scratch_operands = 0 : i64, tpu.core_type = #tpu.core_type<tc>, window_params = [{transform_indices = @transform_0, window_bounds = array<i64: 16, 128>}, {transform_indices = @transform_1, window_bounds = array<i64: 16, 1>}]} {
    %c0_i32 = arith.constant 0 : i32
    %0 = arith.cmpi eq, %arg1, %c0_i32 : i32
    %1 = arith.extui %0 : i1 to i32
    %c0_i32_0 = arith.constant 0 : i32
    %2 = arith.cmpi ne, %1, %c0_i32_0 : i32
    scf.if %2 {
      %cst_7 = arith.constant 0.000000e+00 : f32
      %12 = vector.broadcast %cst_7 : f32 to vector<16x1xf32>
      %c0_8 = arith.constant 0 : index
      %c0_9 = arith.constant 0 : index
      %13 = vector.load %arg3[%c0_8, %c0_9] : memref<16x1xf32, #tpu.memory_space<vmem>>, vector<16x1xf32>
      tpu.vector_store %arg3[%c0_8, %c0_9], %12 {strides = array<i32>} : memref<16x1xf32, #tpu.memory_space<vmem>>, vector<16x1xf32>,
    } else {
    }
    %c0 = arith.constant 0 : index
    %c0_1 = arith.constant 0 : index
    %3 = vector.load %arg3[%c0, %c0_1] : memref<16x1xf32, #tpu.memory_space<vmem>>, vector<16x1xf32>
    %c0_2 = arith.constant 0 : index
    %c0_3 = arith.constant 0 : index
    %4 = vector.load %arg2[%c0_2, %c0_3] : memref<16x128xf32, #tpu.memory_space<vmem>>, vector<16x128xf32>
    %cst = arith.constant dense<0.000000e+00> : vector<16xf32>
    %5 = vector.multi_reduction <add>, %4, %cst [1] : vector<16x128xf32> to vector<16xf32>
    %6 = vector.shape_cast %5 : vector<16xf32> to vector<16x1xf32>
    %7 = arith.addf %3, %6 : vector<16x1xf32>
    %c0_4 = arith.constant 0 : index
    %c0_5 = arith.constant 0 : index
    %8 = vector.load %arg3[%c0_4, %c0_5] : memref<16x1xf32, #tpu.memory_space<vmem>>, vector<16x1xf32>
    tpu.vector_store %arg3[%c0_4, %c0_5], %7 {strides = array<i32>} : memref<16x1xf32, #tpu.memory_space<vmem>>, vector<16x1xf32>,
    %c1_i32 = arith.constant 1 : i32
    %9 = arith.cmpi eq, %arg1, %c1_i32 : i32
    %10 = arith.extui %9 : i1 to i32
    %c0_i32_6 = arith.constant 0 : i32
    %11 = arith.cmpi ne, %10, %c0_i32_6 : i32
    scf.if %11 {
      %c0_7 = arith.constant 0 : index
      %c0_8 = arith.constant 0 : index
      %12 = vector.load %arg3[%c0_7, %c0_8] : memref<16x1xf32, #tpu.memory_space<vmem>>, vector<16x1xf32>
      %cst_9 = arith.constant 3.906250e-03 : f32
      %13 = vector.broadcast %cst_9 : f32 to vector<16x1xf32>
      %14 = arith.mulf %12, %13 : vector<16x1xf32>
      %c0_10 = arith.constant 0 : index
      %c0_11 = arith.constant 0 : index
      %15 = vector.load %arg3[%c0_10, %c0_11] : memref<16x1xf32, #tpu.memory_space<vmem>>, vector<16x1xf32>
      tpu.vector_store %arg3[%c0_10, %c0_11], %14 {strides = array<i32>} : memref<16x1xf32, #tpu.memory_space<vmem>>, vector<16x1xf32>,
    } else {
    }
    return
  }
  func.func @transform_0(%arg0: i32, %arg1: i32) -> (i32, i32) {
    %c0_i32 = arith.constant 0 : i32
    return %arg0, %arg1 : i32, i32
  }
  func.func @transform_1(%arg0: i32, %arg1: i32) -> (i32, i32) {
    %c0_i32 = arith.constant 0 : i32
    %c0_i32_0 = arith.constant 0 : i32
    return %arg0, %c0_i32 : i32, i32
  }
}

</mosaic_0001>

<llo_original>
// kernel: tpu_custom_call.1
$region0: #{tpu_custom_call.1}
  #allocation0 [shape = 'u32[]', space=smem, size = 0x4, offset = 0x4, fixed_abs, tag = 'smem constant byte address 0x4 - core index']
  #allocation1 [shape = 'u32[144,128]{1,0:T(1,128)}', space=vmem, size = 0x12000, scoped, tag = 'internal scratch']
  %s0 = inlined_call_operand.hbm [shape: f32[16,256], index: 0, kind: input, shape index: {}]
  %s1 = inlined_call_operand.vmem [shape: f32[16,1], index: 1, kind: output, shape index: {}]
  %s2 = sld [smem:[#allocation0]]
  $region49: #{tpu_custom_call.1} parent=0
    _
  %s4 = ssub.s32 1, %s2
  %s5 = scalar_select 0, %s4, %s2
  $region1: #{tpu_custom_call.1} parent=0
    #allocation2 [shape = 'u8[16384]{0}', space=vmem, size = 0x4000, scoped, tag = 'input window, operand 0']
    #allocation3 [shape = 's32[2]{0}', space=sflag, size = 0x8, scoped, tag = 'scoped memory for tpu_custom_call.1']
    %6 = vsyncpa [#allocation3], 0
    %s7 = scalar_lea.sflag [#allocation3], 1
    %8 = vsyncpa %s7, 0
    loop: start=0, step=1, limit=4
    $region2: #{tpu_custom_call.1} parent=1 // loop_pre_header
      _
    $region3: #{tpu_custom_call.1} parent=1 // loop_header
      %s10 = sphi 0, %s14
      %p11 = scmp.ge.s32.totalorder %s10, 4
      %s17 = sphi 0, %s29
      %s18 = sphi 0, %s25
      %s19 = sphi 0, %s17
      %s20 = sphi 0, %s18
      %s21 = sphi 0, %s19
      %s22 = sphi 0, %s20
      %s34 = sphi 0, %s36
      %s37 = sphi 0, %s34
      %s38 = sphi 0, %s37
      %s54 = sphi 0, %s38
      %s60 = sphi 0, %s62
      %s63 = sphi 0, %s60
      %s64 = sphi 0, %s63
      %s80 = sphi 0, %s64
    $region4: #{tpu_custom_call.1} parent=1 // loop_header_branch
      %13 = sbr.rel (%p11) target = $region8
    $region5: #{tpu_custom_call.1} parent=1 // loop_body
      %s15 = ssub.s32 %s10, 1
      %s16 = ssub.s32 %s10, 2
      %s23 = sadd.s32 1, %s18
      %p24 = scmp.ge.s32.totalorder %s23, 2
      %s25 = scalar_select %p24, 0, %s23
      %s26 = sadd.s32 1, %s17
      %s27 = scalar_select %p24, %s26, %s17
      %p28 = scmp.ge.s32.totalorder %s27, 1
      %s29 = scalar_select %p28, 0, %s27
      %s30 = ssub.s32 %s17, %s29
      %s31 = ssub.s32 %s18, %s25
      %s32 = sor.u32 %s30, %s31
      %p33 = scmp.eq.s32.totalorder %s32, 0
      %s35 = sadd.s32 %s34, 1
      %s36 = scalar_select %p33, %s34, %s35
      %p39 = pneg %p33
      %p40 = scmp.eq.s32.totalorder %s10, 1
      %p41 = por %p39, %p40
      %p42 = scmp.ne.s32.totalorder %s34, %s37
      %p43 = scmp.eq.s32.totalorder %s10, 0
      %p44 = por %p42, %p43
      %p45 = scmp.ne.s32.totalorder %s34, %s37
      %p46 = scmp.eq.s32.totalorder %s15, 1
      %p47 = por %p45, %p46
      %p48 = scmp.ne.s32.totalorder %s37, %s38
      %p49 = scmp.eq.s32.totalorder %s15, 0
      %p50 = por %p48, %p49
      %p51 = scmp.ne.s32.totalorder %s37, %s38
      %p52 = scmp.eq.s32.totalorder %s16, 1
      %p53 = por %p51, %p52
      %p55 = scmp.ne.s32.totalorder %s38, %s54
      %p56 = scmp.eq.s32.totalorder %s16, 0
      %p57 = por %p55, %p56
      %s58 = ssub.s32 %s17, %s29
      %p59 = scmp.eq.s32.totalorder %s58, 0
      %s61 = sadd.s32 %s60, 1
      %s62 = scalar_select %p59, %s60, %s61
      %p65 = pneg %p59
      %p66 = scmp.eq.s32.totalorder %s10, 1
      %p67 = por %p65, %p66
      %p68 = scmp.ne.s32.totalorder %s60, %s63
      %p69 = scmp.eq.s32.totalorder %s10, 0
      %p70 = por %p68, %p69
      %p71 = scmp.ne.s32.totalorder %s60, %s63
      %p72 = scmp.eq.s32.totalorder %s15, 1
      %p73 = por %p71, %p72
      %p74 = scmp.ne.s32.totalorder %s63, %s64
      %p75 = scmp.eq.s32.totalorder %s15, 0
      %p76 = por %p74, %p75
      %p77 = scmp.ne.s32.totalorder %s63, %s64
      %p78 = scmp.eq.s32.totalorder %s16, 1
      %p79 = por %p77, %p78
      %p81 = scmp.ne.s32.totalorder %s64, %s80
      %p82 = scmp.eq.s32.totalorder %s16, 0
      %p83 = por %p81, %p82
      %p84 = scmp.le.s32.totalorder 1, %s10
      %p85 = scmp.lt.s32.totalorder %s10, 3
      %p86 = pnand %p84, %p85
      %p87 = pneg %p86
      // Predicated region
      $region9: #{tpu_custom_call.1} parent=5 // pred_check
        _
      $region10: #{tpu_custom_call.1} parent=5 // pred_check_branch
        %89 = sbr.rel (%p86) target = $region12
      $region11: #{tpu_custom_call.1} parent=5 // pred_region
        %s90 = ssub.s32 %s10, 1
      $region12: #{tpu_custom_call.1} parent=5 // pred_fallthru
        _
      %p91 = scmp.lt.s32.totalorder %s10, 2
      // Predicated region
      $region13: #{tpu_custom_call.1} parent=5 // pred_check
        %p92 = pneg %p91
      $region14: #{tpu_custom_call.1} parent=5 // pred_check_branch
        %94 = sbr.rel (%p92) target = $region16
      $region15: #{tpu_custom_call.1} parent=5 // pred_region
        // Predicated region
        $region17: #{tpu_custom_call.1} parent=15 // pred_check
          %p95 = pneg %p44
        $region18: #{tpu_custom_call.1} parent=15 // pred_check_branch
          %97 = sbr.rel (%p95) target = $region20
        $region19: #{tpu_custom_call.1} parent=15 // pred_region
          %s98 = sand.u32 %s34, 1
          %s99 = scalar_lea.sflag [#allocation3], %s98
          %s100 = sand.u32 %s34, 1
          %s101 = smul.addr %s100, 16
          %s102 = scalar_lea.vmem [#allocation2], %s101
          %s103 = smul.u32 2, %s17
          %s105 = ssub.s32 256, 256
          %106 = vsyncadd %s99, %s105
          %s107 = smul.addr %s103, 2
          %s108 = sadd.s32 %s18, %s107
          %s109 = smul.addr %s108, 128
          %s110 = scalar_lea.hbm %s0, %s109
          %s111 = sshll.u32 %s102, 4
          %s112 = int_to_ptr.vmem [resolvable:$true] %s111
          %117 = dma.hbm_to_vmem [thread:$0]  %s110, 256, %s112, %s99, 256, 128, 8
        $region20: #{tpu_custom_call.1} parent=15 // pred_fallthru
          _
      $region16: #{tpu_custom_call.1} parent=5 // pred_fallthru
        _
      %p118 = scmp.le.s32.totalorder 1, %s10
      %p119 = scmp.lt.s32.totalorder %s10, 3
      %p120 = pnand %p118, %p119
      %p121 = pneg %p120
      // Predicated region
      $region21: #{tpu_custom_call.1} parent=5 // pred_check
        _
      $region22: #{tpu_custom_call.1} parent=5 // pred_check_branch
        %123 = sbr.rel (%p120) target = $region24
      $region23: #{tpu_custom_call.1} parent=5 // pred_region
        %s124 = ssub.s32 %s10, 1
        %s125 = sand.u32 %s37, 1
        %s126 = scalar_lea.sflag [#allocation3], %s125
        %s127 = sand.u32 %s37, 1
        %s128 = smul.addr %s127, 16
        %s129 = scalar_lea.vmem [#allocation2], %s128
        // Predicated region
        $region25: #{tpu_custom_call.1} parent=23 // pred_check
          %p130 = pneg %p50
        $region26: #{tpu_custom_call.1} parent=23 // pred_check_branch
          %132 = sbr.rel (%p130) target = $region28
        $region27: #{tpu_custom_call.1} parent=23 // pred_region
          %133 = dma.done %s126, 256
        $region28: #{tpu_custom_call.1} parent=23 // pred_fallthru
          _
        %s134 = sand.u32 %s37, 1
        %s135 = scalar_lea.sflag [#allocation3], %s134
        %s136 = sand.u32 %s37, 1
        %s137 = smul.addr %s136, 16
        %s138 = scalar_lea.vmem [#allocation2], %s137
        %p139 = pneg %p50
        %p140 = pneg %p47
        %p141 = pneg %p76
        %p142 = pneg %p73
        %s143 = smul.u32 2, %s19
        %p144 = scmp.lt.s32.totalorder %s143, 1
        %s145 = scalar_select %p144, %s143, 1
        %s146 = smul.addr %s145, 8
        %s147 = scalar_lea.vmem %s1, %s146
        %s148 = smul.u32 2, %s19
        %s149 = smul.u32 2, %s19
        %p150 = scmp.lt.s32.totalorder %s149, 1
        %s151 = scalar_select %p150, %s149, 1
        %s152 = smul.addr %s151, 8
        %s153 = scalar_lea.vmem %s1, %s152
        %s154 = smul.u32 2, %s19
        %p155 = scmp.eq.s32.totalorder %s20, 0
        // Predicated region
        $region29: #{tpu_custom_call.1} parent=23 // pred_check
          %p156 = pneg %p155
        $region30: #{tpu_custom_call.1} parent=23 // pred_check_branch
          %158 = sbr.rel (%p156) target = $region32
        $region31: #{tpu_custom_call.1} parent=23 // pred_region
          %vm159 = vcmask 7168
          %160 = vst.msk [vmem:[%s153] sm:$0xff] %vm159, 0.0
          %161 = vst.msk [vmem:[%s153 + $0x8] sm:$0xff] %vm159, 0.0
        $region32: #{tpu_custom_call.1} parent=23 // pred_fallthru
          _
        %v162 = vld [vmem:[%s153] sm:$0xff]
        %v163 = vld [vmem:[%s153 + $0x8] sm:$0xff]
        %v164 = vld [vmem:[%s129] sm:$0xff]
        %v165 = vld [vmem:[%s129 + $0x8] sm:$0xff]
        %166 = vadd.xlane.f32.xlu0 %v164
        %v167 = vpop.xlane.xlu0 %166
        %168 = vadd.xlane.f32.xlu0 %v165
        %v169 = vpop.xlane.xlu0 %168
        %v170 = vadd.f32 %v162, %v167
        %v171 = vadd.f32 %v163, %v169
        %vm172 = vcmask 7168
        %173 = vst.msk [vmem:[%s153] sm:$0xff] %vm172, %v170
        %174 = vst.msk [vmem:[%s153 + $0x8] sm:$0xff] %vm172, %v171
        %p175 = scmp.eq.s32.totalorder %s20, 1
        // Predicated region
        $region33: #{tpu_custom_call.1} parent=23 // pred_check
          %p176 = pneg %p175
        $region34: #{tpu_custom_call.1} parent=23 // pred_check_branch
          %178 = sbr.rel (%p176) target = $region36
        $region35: #{tpu_custom_call.1} parent=23 // pred_region
          %v179 = vld [vmem:[%s153] sm:$0xff]
          %v180 = vld [vmem:[%s153 + $0x8] sm:$0xff]
          %v181 = vmul.f32 %v179, 0.00390625
          %v182 = vmul.f32 %v180, 0.00390625
          %183 = vst.msk [vmem:[%s153] sm:$0xff] %vm172, %v181
          %184 = vst.msk [vmem:[%s153 + $0x8] sm:$0xff] %vm172, %v182
        $region36: #{tpu_custom_call.1} parent=23 // pred_fallthru
          _
        %s185 = smul.u32 2, %s19
        %p186 = scmp.lt.s32.totalorder %s185, 1
        %s187 = scalar_select %p186, %s185, 1
        %s188 = smul.addr %s187, 8
        %s189 = scalar_lea.vmem %s1, %s188
        // Predicated region
        $region37: #{tpu_custom_call.1} parent=23 // pred_check
          %p190 = pneg %p73
        $region38: #{tpu_custom_call.1} parent=23 // pred_check_branch
          %192 = sbr.rel (%p190) target = $region40
        $region39: #{tpu_custom_call.1} parent=23 // pred_region
          %s193 = smul.u32 2, %s19
        $region40: #{tpu_custom_call.1} parent=23 // pred_fallthru
          _
        // Predicated region
        $region41: #{tpu_custom_call.1} parent=23 // pred_check
          %p194 = pneg %p73
        $region42: #{tpu_custom_call.1} parent=23 // pred_check_branch
          %196 = sbr.rel (%p194) target = $region44
        $region43: #{tpu_custom_call.1} parent=23 // pred_region
          %s197 = smul.u32 2, %s19
          %p198 = scmp.lt.s32.totalorder %s197, 1
          %s199 = scalar_select %p198, %s197, 1
          %s200 = smul.addr %s199, 8
          %s201 = scalar_lea.vmem %s1, %s200
        $region44: #{tpu_custom_call.1} parent=23 // pred_fallthru
          _
      $region24: #{tpu_custom_call.1} parent=5 // pred_fallthru
        _
      %p202 = scmp.le.s32.totalorder 2, %s10
      // Predicated region
      $region45: #{tpu_custom_call.1} parent=5 // pred_check
        %p203 = pneg %p202
      $region46: #{tpu_custom_call.1} parent=5 // pred_check_branch
        %205 = sbr.rel (%p203) target = $region48
      $region47: #{tpu_custom_call.1} parent=5 // pred_region
        %s206 = ssub.s32 %s10, 2
      $region48: #{tpu_custom_call.1} parent=5 // pred_fallthru
        _
    $region6: #{tpu_custom_call.1} parent=1 // loop_footer
      %s14 = sadd.s32 1, %s10
    $region7: #{tpu_custom_call.1} parent=1 // loop_footer_branch
      %9 = sbr.rel target = $region3
    $region8: #{tpu_custom_call.1} parent=1 // loop_exit
      _
    %207 = vsyncpa [#allocation3], 1
    %s208 = scalar_lea.sflag [#allocation3], 1
    %209 = vsyncpa %s208, 1

</llo_original>
